<compile_context>
chip_gen: v7x
topology: tpu7x:2x2x1
jax: 0.10.0
libtpu: 0.0.40
codegen_flags: <defaults>
</compile_context>

<pallas_src>
import functools

import jax
import jax.numpy as jnp
from jax.experimental import pallas as pl
from jax.experimental.pallas import tpu as pltpu

SUBLANE = 8


def _round_up(x, m):
    return ((x + m - 1) // m) * m


def _policy_kernel(x_ref, w1_ref, b1_ref, w2_ref, b2_ref, out_ref, *,
                   compute_dtype):
    # One batch tile per grid step: Linear -> ReLU -> Linear -> row softmax.
    x = x_ref[...].astype(compute_dtype)                           # (TB, K)
    w1 = w1_ref[...].astype(compute_dtype)                         # (K, H)
    h = jnp.dot(x, w1, preferred_element_type=jnp.float32)         # (TB, H) f32
    h = jnp.maximum(h + b1_ref[...], 0.0)

    w2 = w2_ref[...].astype(compute_dtype)                         # (H, A)
    logits = jnp.dot(h.astype(compute_dtype), w2,
                     preferred_element_type=jnp.float32)           # (TB, A) f32
    logits = logits + b2_ref[...]

    # Numerically stable softmax over the (tiny, unpadded) action axis.
    # Exact f32 divide so every row sums to 1 to float precision.
    m = jnp.max(logits, axis=-1, keepdims=True)
    e = jnp.exp(logits - m)
    denom = jnp.sum(e, axis=-1, keepdims=True)
    out_ref[...] = (e / denom).astype(out_ref.dtype)


def policy_forward(state, w1, b1, w2, b2, *, tile_b=2048,
                   compute_dtype=jnp.float32):
    """state: (B, 3*state_size) or (3*state_size,) f32 -> (B, action_size)."""
    if state.ndim == 1:
        state = state[None, :]
    B, K = state.shape
    H = w1.shape[1]
    A = w2.shape[1]

    # Batch tile: one big tile for small batches (amortizes the ~0.35us/step
    # overhead); for larger batches give the "parallel" axis >=2 steps so both
    # v7x TensorCores get work.  Always a multiple of 8 sublanes; the final
    # partial tile is masked by Pallas, so B itself is never padded.
    steps_wanted = 2 if B >= 1024 else 1
    TB = min(tile_b, _round_up(pl.cdiv(B, steps_wanted), SUBLANE))
    TB = max(_round_up(TB, SUBLANE), SUBLANE)
    grid = (pl.cdiv(B, TB),)

    kernel = functools.partial(_policy_kernel, compute_dtype=compute_dtype)
    cost = pl.CostEstimate(
        flops=2 * B * (K * H + H * A),
        transcendentals=B * A,
        bytes_accessed=4 * (B * K + K * H + H + H * A + A + B * A),
    )

    out = pl.pallas_call(
        kernel,
        out_shape=jax.ShapeDtypeStruct((B, A), jnp.float32),
        grid=grid,
        in_specs=[
            pl.BlockSpec((TB, K), lambda i: (i, 0)),   # state tile (partial last tile masked)
            pl.BlockSpec((K, H), lambda i: (0, 0)),    # w1 (resident)
            pl.BlockSpec((1, H), lambda i: (0, 0)),    # b1 (resident)
            pl.BlockSpec((H, A), lambda i: (0, 0)),    # w2 (resident)
            pl.BlockSpec((1, A), lambda i: (0, 0)),    # b2 (resident)
        ],
        out_specs=pl.BlockSpec((TB, A), lambda i: (i, 0)),
        compiler_params=pltpu.CompilerParams(
            dimension_semantics=("parallel",)),        # megacore on v7x
        cost_estimate=cost,
    )(state, w1, b1, w2, b2)
    return out


def init_params(key, state_size=4, action_size=2, hidden_size=32):
    in_features = 3 * state_size
    k1, k2, k3, k4 = jax.random.split(key, 4)
    # Deterministic synthetic init (uniform, PyTorch-Linear-like bounds).
    bound1 = 1.0 / jnp.sqrt(in_features)
    bound2 = 1.0 / jnp.sqrt(hidden_size)
    w1 = jax.random.uniform(k1, (in_features, hidden_size), jnp.float32,
                            -bound1, bound1)
    b1 = jax.random.uniform(k2, (1, hidden_size), jnp.float32, -bound1, bound1)
    w2 = jax.random.uniform(k3, (hidden_size, action_size), jnp.float32,
                            -bound2, bound2)
    b2 = jax.random.uniform(k4, (1, action_size), jnp.float32, -bound2, bound2)
    return w1, b1, w2, b2


if __name__ == "__main__":
    key = jax.random.PRNGKey(0)
    state_size, action_size, hidden_size = 4, 2, 32
    batch = 2

    kp, kx = jax.random.split(key)
    w1, b1, w2, b2 = init_params(kp, state_size, action_size, hidden_size)
    state = jax.random.normal(kx, (batch, 3 * state_size), jnp.float32)

    def ref(s):
        h = jnp.maximum(s @ w1 + b1, 0.0)
        return jax.nn.softmax(h @ w2 + b2, axis=1)

    # Small-batch check (matches the PyTorch module shapes).
    probs = jax.block_until_ready(policy_forward(state, w1, b1, w2, b2))
    probs_ref = ref(state)
    assert probs.shape == (batch, action_size)
    assert jnp.allclose(probs, probs_ref, atol=5e-3, rtol=5e-3)
    assert jnp.allclose(jnp.sum(probs, axis=1), 1.0, atol=1e-3)

    # 1-D input path (PyTorch prepends a batch dim).
    probs_1d = jax.block_until_ready(policy_forward(state[0], w1, b1, w2, b2))
    assert probs_1d.shape == (1, action_size)
    assert jnp.allclose(probs_1d, probs_ref[:1], atol=5e-3, rtol=5e-3)

    # Larger batch exercising multiple grid tiles, incl. a partial last tile.
    big = jax.random.normal(jax.random.PRNGKey(1), (520, 3 * state_size),
                            jnp.float32)
    probs_big = jax.block_until_ready(
        policy_forward(big, w1, b1, w2, b2, tile_b=256))
    assert probs_big.shape == (520, action_size)
    assert jnp.allclose(probs_big, ref(big), atol=5e-3, rtol=5e-3)
    assert jnp.allclose(jnp.sum(probs_big, axis=1), 1.0, atol=1e-3)

    # bf16 MXU path (recommended on v6e/v7x); accumulation/softmax stay f32.
    probs_bf16 = jax.block_until_ready(
        policy_forward(state, w1, b1, w2, b2, compute_dtype=jnp.bfloat16))
    assert probs_bf16.shape == (batch, action_size)
    assert jnp.allclose(probs_bf16, probs_ref, atol=3e-2, rtol=3e-2)
    assert jnp.allclose(jnp.sum(probs_bf16, axis=1), 1.0, atol=1e-3)

    # TODO(synk): Policy.act()'s Categorical sampling / log_prob is host-side
    # PyTorch logic outside forward(); not part of this kernel.
    print("KERNEL_OK")
</pallas_src>

<mosaic_0001>
module attributes {stable_mosaic.version = 11 : i64} {
  func.func @_policy_kernel(%arg0: i32, %arg1: memref<8x12xf32, #tpu.memory_space<vmem>>, %arg2: memref<12x32xf32, #tpu.memory_space<vmem>>, %arg3: memref<1x32xf32, #tpu.memory_space<vmem>>, %arg4: memref<32x2xf32, #tpu.memory_space<vmem>>, %arg5: memref<1x2xf32, #tpu.memory_space<vmem>>, %arg6: memref<8x2xf32, #tpu.memory_space<vmem>>) attributes {dimension_semantics = [#tpu.dimension_semantics<parallel>], iteration_bounds = array<i64: 1>, scalar_prefetch = 0 : i64, scratch_operands = 0 : i64, tpu.core_type = #tpu.core_type<tc>, window_params = [{transform_indices = @transform_0, window_bounds = array<i64: 8, 12>}, {pipeline_mode = #tpu.pipeline_mode<synchronous>, transform_indices = @transform_1, window_bounds = array<i64: 12, 32>}, {pipeline_mode = #tpu.pipeline_mode<synchronous>, transform_indices = @transform_2, window_bounds = array<i64: 1, 32>}, {pipeline_mode = #tpu.pipeline_mode<synchronous>, transform_indices = @transform_3, window_bounds = array<i64: 32, 2>}, {pipeline_mode = #tpu.pipeline_mode<synchronous>, transform_indices = @transform_4, window_bounds = array<i64: 1, 2>}, {transform_indices = @transform_5, window_bounds = array<i64: 8, 2>}]} {
    %c0 = arith.constant 0 : index
    %c0_0 = arith.constant 0 : index
    %0 = vector.load %arg1[%c0, %c0_0] : memref<8x12xf32, #tpu.memory_space<vmem>>, vector<8x12xf32>
    %c0_1 = arith.constant 0 : index
    %c0_2 = arith.constant 0 : index
    %1 = vector.load %arg2[%c0_1, %c0_2] : memref<12x32xf32, #tpu.memory_space<vmem>>, vector<12x32xf32>
    %cst = arith.constant dense<0.000000e+00> : vector<8x32xf32>
    %2 = tpu.matmul %0, %1, %cst {dimension_numbers = #tpu.dot_dimension_numbers<[1], [0], [0], [1], [0, 0, 1, 1], [], []>} : vector<8x12xf32>, vector<12x32xf32>, vector<8x32xf32> -> vector<8x32xf32>
    %c0_3 = arith.constant 0 : index
    %c0_4 = arith.constant 0 : index
    %3 = vector.load %arg3[%c0_3, %c0_4] : memref<1x32xf32, #tpu.memory_space<vmem>>, vector<1x32xf32>
    %4 = vector.broadcast %3 : vector<1x32xf32> to vector<8x32xf32>
    %5 = arith.addf %2, %4 : vector<8x32xf32>
    %cst_5 = arith.constant 0.000000e+00 : f32
    %6 = vector.broadcast %cst_5 : f32 to vector<8x32xf32>
    %7 = arith.maximumf %5, %6 : vector<8x32xf32>
    %c0_6 = arith.constant 0 : index
    %c0_7 = arith.constant 0 : index
    %8 = vector.load %arg4[%c0_6, %c0_7] : memref<32x2xf32, #tpu.memory_space<vmem>>, vector<32x2xf32>
    %cst_8 = arith.constant dense<0.000000e+00> : vector<8x2xf32>
    %9 = tpu.matmul %7, %8, %cst_8 {dimension_numbers = #tpu.dot_dimension_numbers<[1], [0], [0], [1], [0, 0, 1, 1], [], []>} : vector<8x32xf32>, vector<32x2xf32>, vector<8x2xf32> -> vector<8x2xf32>
    %c0_9 = arith.constant 0 : index
    %c0_10 = arith.constant 0 : index
    %10 = vector.load %arg5[%c0_9, %c0_10] : memref<1x2xf32, #tpu.memory_space<vmem>>, vector<1x2xf32>
    %11 = vector.broadcast %10 : vector<1x2xf32> to vector<8x2xf32>
    %12 = arith.addf %9, %11 : vector<8x2xf32>
    %cst_11 = arith.constant dense<0xFF800000> : vector<8xf32>
    %13 = vector.multi_reduction <maximumf>, %12, %cst_11 [1] : vector<8x2xf32> to vector<8xf32>
    %14 = vector.shape_cast %13 : vector<8xf32> to vector<8x1xf32>
    %15 = vector.broadcast %14 : vector<8x1xf32> to vector<8x2xf32>
    %16 = arith.subf %12, %15 : vector<8x2xf32>
    %17 = math.exp %16 : vector<8x2xf32>
    %cst_12 = arith.constant dense<0.000000e+00> : vector<8xf32>
    %18 = vector.multi_reduction <add>, %17, %cst_12 [1] : vector<8x2xf32> to vector<8xf32>
    %19 = vector.shape_cast %18 : vector<8xf32> to vector<8x1xf32>
    %20 = vector.broadcast %19 : vector<8x1xf32> to vector<8x2xf32>
    %21 = arith.divf %17, %20 : vector<8x2xf32>
    %c0_13 = arith.constant 0 : index
    %c0_14 = arith.constant 0 : index
    %22 = vector.load %arg6[%c0_13, %c0_14] : memref<8x2xf32, #tpu.memory_space<vmem>>, vector<8x2xf32>
    tpu.vector_store %arg6[%c0_13, %c0_14], %21 {strides = array<i32>} : memref<8x2xf32, #tpu.memory_space<vmem>>, vector<8x2xf32>,
    return
  }
  func.func @transform_0(%arg0: i32) -> (i32, i32) {
    %c0_i32 = arith.constant 0 : i32
    %c0_i32_0 = arith.constant 0 : i32
    return %arg0, %c0_i32 : i32, i32
  }
  func.func @transform_1(%arg0: i32) -> (i32, i32) {
    %c0_i32 = arith.constant 0 : i32
    %c0_i32_0 = arith.constant 0 : i32
    %c0_i32_1 = arith.constant 0 : i32
    return %c0_i32, %c0_i32_0 : i32, i32
  }
  func.func @transform_2(%arg0: i32) -> (i32, i32) {
    %c0_i32 = arith.constant 0 : i32
    %c0_i32_0 = arith.constant 0 : i32
    %c0_i32_1 = arith.constant 0 : i32
    return %c0_i32, %c0_i32_0 : i32, i32
  }
  func.func @transform_3(%arg0: i32) -> (i32, i32) {
    %c0_i32 = arith.constant 0 : i32
    %c0_i32_0 = arith.constant 0 : i32
    %c0_i32_1 = arith.constant 0 : i32
    return %c0_i32, %c0_i32_0 : i32, i32
  }
  func.func @transform_4(%arg0: i32) -> (i32, i32) {
    %c0_i32 = arith.constant 0 : i32
    %c0_i32_0 = arith.constant 0 : i32
    %c0_i32_1 = arith.constant 0 : i32
    return %c0_i32, %c0_i32_0 : i32, i32
  }
  func.func @transform_5(%arg0: i32) -> (i32, i32) {
    %c0_i32 = arith.constant 0 : i32
    %c0_i32_0 = arith.constant 0 : i32
    return %arg0, %c0_i32 : i32, i32
  }
}

</mosaic_0001>

<llo_original>
// kernel: tpu_custom_call.1
$region0: #{tpu_custom_call.1}
  #allocation0 [shape = 'u32[]', space=smem, size = 0x4, offset = 0x4, fixed_abs, tag = 'smem constant byte address 0x4 - core index']
  #allocation1 [shape = 'u32[144,128]{1,0:T(1,128)}', space=vmem, size = 0x12000, scoped, tag = 'internal scratch']
  %s0 = inlined_call_operand.vmem [shape: f32[2,12], index: 0, kind: input, shape index: {}]
  %s1 = inlined_call_operand.vmem [shape: f32[12,32], index: 1, kind: input, shape index: {}]
  %s2 = inlined_call_operand.vmem [shape: f32[1,32], index: 2, kind: input, shape index: {}]
  %s3 = inlined_call_operand.vmem [shape: f32[32,2], index: 3, kind: input, shape index: {}]
  %s4 = inlined_call_operand.vmem [shape: f32[1,2], index: 4, kind: input, shape index: {}]
  %s5 = inlined_call_operand.hbm [shape: f32[2,2], index: 5, kind: output, shape index: {}]
  %s6 = sld [smem:[#allocation0]]
  $region30: #{tpu_custom_call.1} parent=0
    _
  %s8 = ssub.s32 1, %s6
  %s9 = scalar_select 0, %s8, %s6
  $region1: #{tpu_custom_call.1} parent=0
    #allocation2 [shape = 'u8[4096]{0}', space=vmem, size = 0x1000, scoped, tag = 'output window, operand 0, single buffered']
    #allocation3 [shape = 's32[1]{0}', space=sflag, size = 0x4, scoped, tag = 'scoped memory for tpu_custom_call.1']
    %10 = vsyncpa [#allocation3], 0
    // Predicated region
    $region2: #{tpu_custom_call.1} parent=1 // pred_check
      _
    $region3: #{tpu_custom_call.1} parent=1 // pred_check_branch
      %12 = sbr.rel (0) target = $region5
    $region4: #{tpu_custom_call.1} parent=1 // pred_region
      _
    $region5: #{tpu_custom_call.1} parent=1 // pred_fallthru
      _
    // Predicated region
    $region6: #{tpu_custom_call.1} parent=1 // pred_check
      _
    $region7: #{tpu_custom_call.1} parent=1 // pred_check_branch
      %14 = sbr.rel (0) target = $region9
    $region8: #{tpu_custom_call.1} parent=1 // pred_region
      _
    $region9: #{tpu_custom_call.1} parent=1 // pred_fallthru
      _
    // Predicated region
    $region10: #{tpu_custom_call.1} parent=1 // pred_check
      _
    $region11: #{tpu_custom_call.1} parent=1 // pred_check_branch
      %16 = sbr.rel (0) target = $region13
    $region12: #{tpu_custom_call.1} parent=1 // pred_region
      _
    $region13: #{tpu_custom_call.1} parent=1 // pred_fallthru
      _
    // Predicated region
    $region14: #{tpu_custom_call.1} parent=1 // pred_check
      _
    $region15: #{tpu_custom_call.1} parent=1 // pred_check_branch
      %18 = sbr.rel (0) target = $region17
    $region16: #{tpu_custom_call.1} parent=1 // pred_region
      _
    $region17: #{tpu_custom_call.1} parent=1 // pred_fallthru
      _
    // Predicated region
    $region18: #{tpu_custom_call.1} parent=1 // pred_check
      _
    $region19: #{tpu_custom_call.1} parent=1 // pred_check_branch
      %20 = sbr.rel (0) target = $region21
    $region20: #{tpu_custom_call.1} parent=1 // pred_region
      _
    $region21: #{tpu_custom_call.1} parent=1 // pred_fallthru
      _
    %v21 = vld [vmem:[%s0] sm:$0xff]
    %v22 = vld [vmem:[%s1] sm:$0xff]
    %v23 = vld [vmem:[%s1 + $0x8] sm:$0xf]
    %v24 = vld [vmem:[%s2] sm:$0x1]
    %v26 = vlaneseq
    %v27 = vshrl.u32 %v26, 7
    %v28 = vsub.s32 0, %v27
    %v29 = vrot.slane %v24, %v28
    %vm31 = vcmask 97280
    %v33 = vsel %vm31, %v21, 0
    %vm35 = vcmask 1043456
    %v37 = vsel %vm35, %v23, 0
    %39 = vmatprep.subr.mxu0 0.0
    %40 = vmatpush1.msra.mxu0 %v22
    %41 = vmatprep.subr.mxu0 0.0
    %42 = vmatpush1.msra.mxu0 %v37
    %43 = vmatprep.subr.mxu0 0.0
    %44 = vmatpush1.msra.mxu0 0.0
    %45 = vmatprep.subr.mxu0 0.0
    %46 = vmatpush1.msra.mxu0 0.0
    %47 = vmatprep.subr.mxu0 0.0
    %48 = vmatpush1.msra.mxu0 0.0
    %49 = vmatprep.subr.mxu0 0.0
    %50 = vmatpush1.msra.mxu0 0.0
    %51 = vmatprep.subr.mxu0 0.0
    %52 = vmatpush1.msra.mxu0 0.0
    %53 = vmatprep.subr.mxu0 0.0
    %54 = vmatpush1.msra.mxu0 0.0
    %55 = vmatprep.subr.mxu0 0.0
    %56 = vmatpush1.msra.mxu0 0.0
    %57 = vmatprep.subr.mxu0 0.0
    %58 = vmatpush1.msra.mxu0 0.0
    %59 = vmatprep.subr.mxu0 0.0
    %60 = vmatpush1.msra.mxu0 0.0
    %61 = vmatprep.subr.mxu0 0.0
    %62 = vmatpush1.msra.mxu0 0.0
    %63 = vmatprep.subr.mxu0 0.0
    %64 = vmatpush1.msra.mxu0 0.0
    %65 = vmatprep.subr.mxu0 0.0
    %66 = vmatpush1.msra.mxu0 0.0
    %67 = vmatprep.subr.mxu0 0.0
    %68 = vmatpush1.msra.mxu0 0.0
    %69 = vmatprep.subr.mxu0 0.0
    %70 = vmatpush1.msra.mxu0 0.0
    %71 = vmatprep.subr.mxu0 0.0
    %72 = vmatpush1.msra.mxu0 0.0
    %73 = vmatprep.subr.mxu0 0.0
    %74 = vmatpush1.msra.mxu0 0.0
    %75 = vmatprep.subr.mxu0 0.0
    %76 = vmatpush1.msra.mxu0 0.0
    %77 = vmatprep.subr.mxu0 0.0
    %78 = vmatpush1.msra.mxu0 0.0
    %79 = vmatprep.subr.mxu0 0.0
    %80 = vmatpush1.msra.mxu0 0.0
    %81 = vmatprep.subr.mxu0 0.0
    %82 = vmatpush1.msra.mxu0 0.0
    %83 = vmatprep.subr.mxu0 0.0
    %84 = vmatpush1.msra.mxu0 0.0
    %85 = vmatprep.subr.mxu0 0.0
    %86 = vmatpush1.msra.mxu0 0.0
    %87 = vmatprep.subr.mxu0 0.0
    %88 = vmatpush1.msra.mxu0 0.0
    %89 = vmatprep.subr.mxu0 0.0
    %90 = vmatpush1.msra.mxu0 0.0
    %91 = vmatprep.subr.mxu0 0.0
    %92 = vmatpush1.msra.mxu0 0.0
    %93 = vmatprep.subr.mxu0 0.0
    %94 = vmatpush1.msra.mxu0 0.0
    %95 = vmatprep.subr.mxu0 0.0
    %96 = vmatpush1.msra.mxu0 0.0
    %97 = vmatprep.subr.mxu0 0.0
    %98 = vmatpush1.msra.mxu0 0.0
    %99 = vmatprep.subr.mxu0 0.0
    %100 = vmatpush1.msra.mxu0 0.0
    %101 = vmatprep.subr.mxu0 0.0
    %102 = vmatpush1.msra.mxu0 0.0
    %103 = vmatprep.mubr.f32.mxu0 0.0
    %104 = vmatmul.mubr.f32.gmra.mrb[0].mxu0 %v33
    %v105 = vpop.f32.mrb[0].mxu0
    %v106 = vadd.f32 %v29, %v105
    %v107 = vpop.f32.mrb[0].mxu0
    %108 = vdwg.mxu0
    %v109 = vmax.f32 %v106, 0.0
    %v110 = vld [vmem:[%s3] sm:$0xff]
    %v111 = vld [vmem:[%s3 + $0x8] sm:$0xff]
    %v112 = vld [vmem:[%s3 + $0x10] sm:$0xff]
    %v113 = vld [vmem:[%s3 + $0x18] sm:$0xff]
    %v114 = vld [vmem:[%s4] sm:$0x1]
    %v116 = vlaneseq
    %v117 = vshrl.u32 %v116, 7
    %v118 = vsub.s32 0, %v117
    %v119 = vrot.slane %v114, %v118
    %vm121 = vcmask 261120
    %v123 = vsel %vm121, %v109, 0
    %125 = vmatprep.subr.mxu0 0.0
    %126 = vmatpush1.msra.mxu0 %v110
    %127 = vmatprep.subr.mxu0 0.0
    %128 = vmatpush1.msra.mxu0 %v111
    %129 = vmatprep.subr.mxu0 0.0
    %130 = vmatpush1.msra.mxu0 %v112
    %131 = vmatprep.subr.mxu0 0.0
    %132 = vmatpush1.msra.mxu0 %v113
    %133 = vmatprep.subr.mxu0 0.0
    %134 = vmatpush1.msra.mxu0 0.0
    %135 = vmatprep.subr.mxu0 0.0
    %136 = vmatpush1.msra.mxu0 0.0
    %137 = vmatprep.subr.mxu0 0.0
    %138 = vmatpush1.msra.mxu0 0.0
    %139 = vmatprep.subr.mxu0 0.0
    %140 = vmatpush1.msra.mxu0 0.0
    %141 = vmatprep.subr.mxu0 0.0
    %142 = vmatpush1.msra.mxu0 0.0
    %143 = vmatprep.subr.mxu0 0.0
    %144 = vmatpush1.msra.mxu0 0.0
    %145 = vmatprep.subr.mxu0 0.0
    %146 = vmatpush1.msra.mxu0 0.0
    %147 = vmatprep.subr.mxu0 0.0
    %148 = vmatpush1.msra.mxu0 0.0
    %149 = vmatprep.subr.mxu0 0.0
    %150 = vmatpush1.msra.mxu0 0.0
    %151 = vmatprep.subr.mxu0 0.0
    %152 = vmatpush1.msra.mxu0 0.0
    %153 = vmatprep.subr.mxu0 0.0
    %154 = vmatpush1.msra.mxu0 0.0
    %155 = vmatprep.subr.mxu0 0.0
    %156 = vmatpush1.msra.mxu0 0.0
    %157 = vmatprep.subr.mxu0 0.0
    %158 = vmatpush1.msra.mxu0 0.0
    %159 = vmatprep.subr.mxu0 0.0
    %160 = vmatpush1.msra.mxu0 0.0
    %161 = vmatprep.subr.mxu0 0.0
    %162 = vmatpush1.msra.mxu0 0.0
    %163 = vmatprep.subr.mxu0 0.0
    %164 = vmatpush1.msra.mxu0 0.0
    %165 = vmatprep.subr.mxu0 0.0
    %166 = vmatpush1.msra.mxu0 0.0
    %167 = vmatprep.subr.mxu0 0.0
    %168 = vmatpush1.msra.mxu0 0.0
    %169 = vmatprep.subr.mxu0 0.0
    %170 = vmatpush1.msra.mxu0 0.0
    %171 = vmatprep.subr.mxu0 0.0
    %172 = vmatpush1.msra.mxu0 0.0
    %173 = vmatprep.subr.mxu0 0.0
    %174 = vmatpush1.msra.mxu0 0.0
    %175 = vmatprep.subr.mxu0 0.0
    %176 = vmatpush1.msra.mxu0 0.0
    %177 = vmatprep.subr.mxu0 0.0
    %178 = vmatpush1.msra.mxu0 0.0
    %179 = vmatprep.subr.mxu0 0.0
    %180 = vmatpush1.msra.mxu0 0.0
    %181 = vmatprep.subr.mxu0 0.0
    %182 = vmatpush1.msra.mxu0 0.0
    %183 = vmatprep.subr.mxu0 0.0
    %184 = vmatpush1.msra.mxu0 0.0
    %185 = vmatprep.subr.mxu0 0.0
    %186 = vmatpush1.msra.mxu0 0.0
    %187 = vmatprep.subr.mxu0 0.0
    %188 = vmatpush1.msra.mxu0 0.0
    %189 = vmatprep.mubr.f32.mxu0 0.0
    %190 = vmatmul.mubr.f32.gmra.mrb[0].mxu0 %v123
    %v191 = vpop.f32.mrb[0].mxu0
    %v192 = vadd.f32 %v119, %v191
    %v193 = vpop.f32.mrb[0].mxu0
    %194 = vdwg.mxu0
    %vm195 = vcmask 15360
    %v196 = vsel %vm195, %v192, -inf
    %197 = vmax.xlane.f32.xlu0 %v196
    %v198 = vpop.xlane.xlu0 %197
    %v199 = vsub.f32 %v192, %v198
    %v200 = vmul.f32 %v199, 1.442695
    %v201 = vpow.pop %v200
    %v202 = vsel %vm195, %v201, 0.0
    %203 = vadd.xlane.f32.xlu0 %v202
    %v204 = vpop.xlane.xlu0 %203
    %v205 = vrcp.pop %v204
    %v206 = vmul.f32 %v201, %v205
    %207 = vst.msk [vmem:[#allocation2] sm:$0xff] %vm195, %v206
    // Predicated region
    $region22: #{tpu_custom_call.1} parent=1 // pred_check
      _
    $region23: #{tpu_custom_call.1} parent=1 // pred_check_branch
      %209 = sbr.rel (0) target = $region25
    $region24: #{tpu_custom_call.1} parent=1 // pred_region
      %s211 = ssub.s32 128, 32
      %212 = vsyncadd [#allocation3], %s211
      %s213 = sshll.u32 [#allocation2], 4
      %s214 = int_to_ptr.vmem [resolvable:$true] %s213
      %219 = dma.vmem_to_hbm [thread:$0]  %s214, 32, %s5, [#allocation3], 32, 32, 2
    $region25: #{tpu_custom_call.1} parent=1 // pred_fallthru
      _
    // Predicated region
    $region26: #{tpu_custom_call.1} parent=1 // pred_check
      _
    $region27: #{tpu_custom_call.1} parent=1 // pred_check_branch
      %221 = sbr.rel (0) target = $region29
    $region28: #{tpu_custom_call.1} parent=1 // pred_region
      %222 = dma.done [#allocation3], 128
    $region29: #{tpu_custom_call.1} parent=1 // pred_fallthru
      _
    %223 = vsyncpa [#allocation3], 1

</llo_original>
